<compile_context>
chip_gen: v6e
topology: v6e:2x2x1
jax: 0.10.0
libtpu: 0.0.40
codegen_flags: <defaults>
</compile_context>

<pallas_src>
import jax
import jax.numpy as jnp
from jax.experimental import pallas as pl
from jax.experimental.pallas import tpu as pltpu

STATE_DIM = 4               # CartPole-v1 observation_space.shape[0]
ACTION_DIM = 2              # CartPole-v1 action_space.n
HIDDEN = 128
HEAD_OUT = ACTION_DIM + 1   # policy logits + value, fused
HEAD_PAD = 8                # compact head width (full-array last dim in BlockSpec)


def actor_critic_kernel(x_ref, w1_ref, b1_ref, wh_ref, bh_ref, out_ref):
    x = x_ref[...].astype(jnp.float32)       # (tb, STATE_DIM)
    w1 = w1_ref[...].astype(jnp.float32)     # (STATE_DIM, HIDDEN)
    # Layer 1: K=4 contraction on the VPU as 4 broadcast-FMAs (an MXU pass here
    # would pad the contraction dim to 128/256 -> >=97% wasted MXU cycles).
    h = b1_ref[...]                          # (1, HIDDEN) f32, broadcasts over rows
    h = h + x[:, 0:1] * w1[0:1, :]
    h = h + x[:, 1:2] * w1[1:2, :]
    h = h + x[:, 2:3] * w1[2:3, :]
    h = h + x[:, 3:4] * w1[3:4, :]
    h = jnp.maximum(h, 0.0)                  # (tb, HIDDEN) f32, ReLU
    # Fused heads: one MXU matmul to the compact 8-lane output, f32 accumulate.
    out_ref[...] = (
        jnp.dot(h.astype(wh_ref.dtype), wh_ref[...],
                preferred_element_type=jnp.float32)
        + bh_ref[...]
    )


def prepack_params(params, compute_dtype=jnp.bfloat16):
    """One-time packing of the two heads into a compact fused weight/bias.

    Call this once after init / after each optimizer step; the forward path
    then does no per-call packing work.
    """
    w1, b1, wp, bp, wv, bv = params
    wh = jnp.zeros((HIDDEN, HEAD_PAD), jnp.float32)
    wh = wh.at[:, :ACTION_DIM].set(wp)
    wh = wh.at[:, ACTION_DIM:HEAD_OUT].set(wv)
    bh = jnp.zeros((1, HEAD_PAD), jnp.float32)
    bh = bh.at[:, :ACTION_DIM].set(bp)
    bh = bh.at[:, ACTION_DIM:HEAD_OUT].set(bv)
    return (
        w1.astype(compute_dtype),      # (STATE_DIM, HIDDEN)
        b1.astype(jnp.float32),        # (1, HIDDEN)
        wh.astype(compute_dtype),      # (HIDDEN, HEAD_PAD)
        bh.astype(jnp.float32),        # (1, HEAD_PAD)
    )


def actor_critic_forward(x, packed, *, block_b=2048):
    """x: [B, STATE_DIM] float32; packed: output of prepack_params.

    Returns (policy_logits [B, ACTION_DIM], value [B, 1]), both float32."""
    w1, b1, wh, bh = packed
    B = x.shape[0]
    x = x.astype(w1.dtype)   # bf16 cast halves x DMA traffic; accum stays f32

    # Batch tile: multiple of 8 sublanes. For large batches cap at ceil(B/2) so
    # the grid has >=2 steps (shards across v7x's 2 TensorCores); tiny rollout
    # batches stay at a single grid step.
    tb = min(block_b, max(8, B))
    if B >= 1024:
        tb = min(tb, -(-B // 2))
    tb = -(-tb // 8) * 8
    B_pad = -(-B // tb) * tb
    if B_pad != B:
        x = jnp.pad(x, ((0, B_pad - B), (0, 0)))

    bytes_in = (x.size * x.dtype.itemsize
                + w1.size * w1.dtype.itemsize + b1.size * 4
                + wh.size * wh.dtype.itemsize + bh.size * 4)
    cost = pl.CostEstimate(
        flops=2 * B_pad * (STATE_DIM * HIDDEN + HIDDEN * HEAD_OUT),
        transcendentals=0,
        bytes_accessed=bytes_in + B_pad * HEAD_PAD * 4,
    )

    out = pl.pallas_call(
        actor_critic_kernel,
        out_shape=jax.ShapeDtypeStruct((B_pad, HEAD_PAD), jnp.float32),
        grid_spec=pltpu.PrefetchScalarGridSpec(
            num_scalar_prefetch=0,
            grid=(B_pad // tb,),
            in_specs=[
                pl.BlockSpec((tb, STATE_DIM), lambda i: (i, 0)),      # x (tiled)
                pl.BlockSpec((STATE_DIM, HIDDEN), lambda i: (0, 0)),  # w1 (resident)
                pl.BlockSpec((1, HIDDEN), lambda i: (0, 0)),          # b1
                pl.BlockSpec((HIDDEN, HEAD_PAD), lambda i: (0, 0)),   # fused head W
                pl.BlockSpec((1, HEAD_PAD), lambda i: (0, 0)),        # fused head b
            ],
            out_specs=pl.BlockSpec((tb, HEAD_PAD), lambda i: (i, 0)),
        ),
        compiler_params=pltpu.CompilerParams(
            dimension_semantics=("parallel",),
            vmem_limit_bytes=32 * 1024 * 1024,  # portable across v5e/v6e/v7x
        ),
        cost_estimate=cost,
    )(x, w1, b1, wh, bh)

    policy_logits = out[:B, :ACTION_DIM]
    value = out[:B, ACTION_DIM:HEAD_OUT]
    return policy_logits, value


def init_params(key):
    """Deterministic init mimicking nn.Linear defaults (uniform +/- 1/sqrt(fan_in))."""
    k = jax.random.split(key, 6)

    def lin(kw, kb, fan_in, fan_out):
        bound = 1.0 / jnp.sqrt(fan_in)
        w = jax.random.uniform(kw, (fan_in, fan_out), jnp.float32, -bound, bound)
        b = jax.random.uniform(kb, (1, fan_out), jnp.float32, -bound, bound)
        return w, b

    w1, b1 = lin(k[0], k[1], STATE_DIM, HIDDEN)
    wp, bp = lin(k[2], k[3], HIDDEN, ACTION_DIM)
    wv, bv = lin(k[4], k[5], HIDDEN, 1)
    return (w1, b1, wp, bp, wv, bv)


def reference_forward(x, params):
    w1, b1, wp, bp, wv, bv = params
    h = jnp.maximum(x @ w1 + b1, 0.0)
    return h @ wp + bp, h @ wv + bv


if __name__ == "__main__":
    key = jax.random.PRNGKey(0)
    pkey, xkey = jax.random.split(key)

    params = init_params(pkey)
    packed = prepack_params(params)          # one-time; out of the hot path
    fwd = jax.jit(actor_critic_forward)

    B = 8
    x = jax.random.normal(xkey, (B, STATE_DIM), dtype=jnp.float32)

    policy_logits, value = fwd(x, packed)
    policy_logits, value = jax.block_until_ready((policy_logits, value))

    ref_policy, ref_value = reference_forward(x, params)
    assert policy_logits.shape == (B, ACTION_DIM)
    assert value.shape == (B, 1)
    # bf16 inputs/weights with f32 accumulation -> looser tolerance vs f32 ref.
    assert jnp.allclose(policy_logits, ref_policy, atol=5e-2, rtol=5e-2)
    assert jnp.allclose(value, ref_value, atol=5e-2, rtol=5e-2)

    print("KERNEL_OK")
</pallas_src>

<mosaic_0001>
module attributes {stable_mosaic.version = 11 : i64} {
  func.func @actor_critic_kernel(%arg0: i32, %arg1: memref<8x4xbf16, #tpu.memory_space<vmem>>, %arg2: memref<4x128xbf16, #tpu.memory_space<vmem>>, %arg3: memref<1x128xf32, #tpu.memory_space<vmem>>, %arg4: memref<128x8xbf16, #tpu.memory_space<vmem>>, %arg5: memref<1x8xf32, #tpu.memory_space<vmem>>, %arg6: memref<8x8xf32, #tpu.memory_space<vmem>>) attributes {dimension_semantics = [#tpu.dimension_semantics<parallel>], iteration_bounds = array<i64: 1>, scalar_prefetch = 0 : i64, scratch_operands = 0 : i64, tpu.core_type = #tpu.core_type<tc>, window_params = [{transform_indices = @transform_0, window_bounds = array<i64: 8, 4>}, {pipeline_mode = #tpu.pipeline_mode<synchronous>, transform_indices = @transform_1, window_bounds = array<i64: 4, 128>}, {pipeline_mode = #tpu.pipeline_mode<synchronous>, transform_indices = @transform_2, window_bounds = array<i64: 1, 128>}, {pipeline_mode = #tpu.pipeline_mode<synchronous>, transform_indices = @transform_3, window_bounds = array<i64: 128, 8>}, {pipeline_mode = #tpu.pipeline_mode<synchronous>, transform_indices = @transform_4, window_bounds = array<i64: 1, 8>}, {transform_indices = @transform_5, window_bounds = array<i64: 8, 8>}]} {
    %c0 = arith.constant 0 : index
    %c0_0 = arith.constant 0 : index
    %0 = vector.load %arg1[%c0, %c0_0] : memref<8x4xbf16, #tpu.memory_space<vmem>>, vector<8x4xbf16>
    %1 = arith.extf %0 : vector<8x4xbf16> to vector<8x4xf32>
    %c0_1 = arith.constant 0 : index
    %c0_2 = arith.constant 0 : index
    %2 = vector.load %arg2[%c0_1, %c0_2] : memref<4x128xbf16, #tpu.memory_space<vmem>>, vector<4x128xbf16>
    %3 = arith.extf %2 : vector<4x128xbf16> to vector<4x128xf32>
    %c0_3 = arith.constant 0 : index
    %c0_4 = arith.constant 0 : index
    %4 = vector.load %arg3[%c0_3, %c0_4] : memref<1x128xf32, #tpu.memory_space<vmem>>, vector<1x128xf32>
    %5 = vector.extract_strided_slice %1 {offsets = [0, 0], sizes = [8, 1], strides = [1, 1]} : vector<8x4xf32> to vector<8x1xf32>
    %6 = vector.extract_strided_slice %3 {offsets = [0, 0], sizes = [1, 128], strides = [1, 1]} : vector<4x128xf32> to vector<1x128xf32>
    %7 = vector.broadcast %5 : vector<8x1xf32> to vector<8x128xf32>
    %8 = vector.broadcast %6 : vector<1x128xf32> to vector<8x128xf32>
    %9 = arith.mulf %7, %8 : vector<8x128xf32>
    %10 = vector.broadcast %4 : vector<1x128xf32> to vector<8x128xf32>
    %11 = arith.addf %10, %9 : vector<8x128xf32>
    %12 = vector.extract_strided_slice %1 {offsets = [0, 1], sizes = [8, 1], strides = [1, 1]} : vector<8x4xf32> to vector<8x1xf32>
    %13 = vector.extract_strided_slice %3 {offsets = [1, 0], sizes = [1, 128], strides = [1, 1]} : vector<4x128xf32> to vector<1x128xf32>
    %14 = vector.broadcast %12 : vector<8x1xf32> to vector<8x128xf32>
    %15 = vector.broadcast %13 : vector<1x128xf32> to vector<8x128xf32>
    %16 = arith.mulf %14, %15 : vector<8x128xf32>
    %17 = arith.addf %11, %16 : vector<8x128xf32>
    %18 = vector.extract_strided_slice %1 {offsets = [0, 2], sizes = [8, 1], strides = [1, 1]} : vector<8x4xf32> to vector<8x1xf32>
    %19 = vector.extract_strided_slice %3 {offsets = [2, 0], sizes = [1, 128], strides = [1, 1]} : vector<4x128xf32> to vector<1x128xf32>
    %20 = vector.broadcast %18 : vector<8x1xf32> to vector<8x128xf32>
    %21 = vector.broadcast %19 : vector<1x128xf32> to vector<8x128xf32>
    %22 = arith.mulf %20, %21 : vector<8x128xf32>
    %23 = arith.addf %17, %22 : vector<8x128xf32>
    %24 = vector.extract_strided_slice %1 {offsets = [0, 3], sizes = [8, 1], strides = [1, 1]} : vector<8x4xf32> to vector<8x1xf32>
    %25 = vector.extract_strided_slice %3 {offsets = [3, 0], sizes = [1, 128], strides = [1, 1]} : vector<4x128xf32> to vector<1x128xf32>
    %26 = vector.broadcast %24 : vector<8x1xf32> to vector<8x128xf32>
    %27 = vector.broadcast %25 : vector<1x128xf32> to vector<8x128xf32>
    %28 = arith.mulf %26, %27 : vector<8x128xf32>
    %29 = arith.addf %23, %28 : vector<8x128xf32>
    %cst = arith.constant 0.000000e+00 : f32
    %30 = vector.broadcast %cst : f32 to vector<8x128xf32>
    %31 = arith.maximumf %29, %30 : vector<8x128xf32>
    %32 = arith.truncf %31 : vector<8x128xf32> to vector<8x128xbf16>
    %c0_5 = arith.constant 0 : index
    %c0_6 = arith.constant 0 : index
    %33 = vector.load %arg4[%c0_5, %c0_6] : memref<128x8xbf16, #tpu.memory_space<vmem>>, vector<128x8xbf16>
    %cst_7 = arith.constant dense<0.000000e+00> : vector<8x8xf32>
    %34 = tpu.matmul %32, %33, %cst_7 {dimension_numbers = #tpu.dot_dimension_numbers<[1], [0], [0], [1], [0, 0, 1, 1], [], []>} : vector<8x128xbf16>, vector<128x8xbf16>, vector<8x8xf32> -> vector<8x8xf32>
    %c0_8 = arith.constant 0 : index
    %c0_9 = arith.constant 0 : index
    %35 = vector.load %arg5[%c0_8, %c0_9] : memref<1x8xf32, #tpu.memory_space<vmem>>, vector<1x8xf32>
    %36 = vector.broadcast %35 : vector<1x8xf32> to vector<8x8xf32>
    %37 = arith.addf %34, %36 : vector<8x8xf32>
    %c0_10 = arith.constant 0 : index
    %c0_11 = arith.constant 0 : index
    %38 = vector.load %arg6[%c0_10, %c0_11] : memref<8x8xf32, #tpu.memory_space<vmem>>, vector<8x8xf32>
    tpu.vector_store %arg6[%c0_10, %c0_11], %37 {strides = array<i32>} : memref<8x8xf32, #tpu.memory_space<vmem>>, vector<8x8xf32>,
    return
  }
  func.func @transform_0(%arg0: i32) -> (i32, i32) {
    %c0_i32 = arith.constant 0 : i32
    %c0_i32_0 = arith.constant 0 : i32
    return %arg0, %c0_i32 : i32, i32
  }
  func.func @transform_1(%arg0: i32) -> (i32, i32) {
    %c0_i32 = arith.constant 0 : i32
    %c0_i32_0 = arith.constant 0 : i32
    %c0_i32_1 = arith.constant 0 : i32
    return %c0_i32, %c0_i32_0 : i32, i32
  }
  func.func @transform_2(%arg0: i32) -> (i32, i32) {
    %c0_i32 = arith.constant 0 : i32
    %c0_i32_0 = arith.constant 0 : i32
    %c0_i32_1 = arith.constant 0 : i32
    return %c0_i32, %c0_i32_0 : i32, i32
  }
  func.func @transform_3(%arg0: i32) -> (i32, i32) {
    %c0_i32 = arith.constant 0 : i32
    %c0_i32_0 = arith.constant 0 : i32
    %c0_i32_1 = arith.constant 0 : i32
    return %c0_i32, %c0_i32_0 : i32, i32
  }
  func.func @transform_4(%arg0: i32) -> (i32, i32) {
    %c0_i32 = arith.constant 0 : i32
    %c0_i32_0 = arith.constant 0 : i32
    %c0_i32_1 = arith.constant 0 : i32
    return %c0_i32, %c0_i32_0 : i32, i32
  }
  func.func @transform_5(%arg0: i32) -> (i32, i32) {
    %c0_i32 = arith.constant 0 : i32
    %c0_i32_0 = arith.constant 0 : i32
    return %arg0, %c0_i32 : i32, i32
  }
}

</mosaic_0001>

<llo_original>
// kernel: actor_critic_forward.1
$region0: #{actor_critic_forward.1}
  #allocation0 [shape = 'u32[]', space=smem, size = 0x4, offset = 0x4, fixed_abs, tag = 'smem constant byte address 0x4 - core index']
  #allocation1 [shape = 'u32[144,128]{1,0:T(1,128)}', space=vmem, size = 0x12000, scoped, tag = 'internal scratch']
  %s0 = inlined_call_operand.vmem [shape: bf16[8,4], index: 0, kind: input, shape index: {}]
  %s1 = inlined_call_operand.vmem [shape: bf16[4,128], index: 1, kind: input, shape index: {}]
  %s2 = inlined_call_operand.vmem [shape: f32[1,128], index: 2, kind: input, shape index: {}]
  %s3 = inlined_call_operand.vmem [shape: bf16[128,8], index: 3, kind: input, shape index: {}]
  %s4 = inlined_call_operand.vmem [shape: f32[1,8], index: 4, kind: input, shape index: {}]
  %s5 = inlined_call_operand.vmem [shape: f32[8,8], index: 5, kind: output, shape index: {}]
  %s6 = sld [smem:[#allocation0]]
  $region30: #{actor_critic_forward.1} parent=0
    _
  %s8 = ssub.s32 1, %s6
  %s9 = scalar_select 0, %s8, %s6
  // Predicated region
  $region2: #{actor_critic_forward.1} parent=0 // pred_check
    _
  $region3: #{actor_critic_forward.1} parent=0 // pred_check_branch
    %11 = sbr.rel (0) target = $region5
  $region4: #{actor_critic_forward.1} parent=0 // pred_region
    _
  $region5: #{actor_critic_forward.1} parent=0 // pred_fallthru
    _
  // Predicated region
  $region6: #{actor_critic_forward.1} parent=0 // pred_check
    _
  $region7: #{actor_critic_forward.1} parent=0 // pred_check_branch
    %13 = sbr.rel (0) target = $region9
  $region8: #{actor_critic_forward.1} parent=0 // pred_region
    _
  $region9: #{actor_critic_forward.1} parent=0 // pred_fallthru
    _
  // Predicated region
  $region10: #{actor_critic_forward.1} parent=0 // pred_check
    _
  $region11: #{actor_critic_forward.1} parent=0 // pred_check_branch
    %15 = sbr.rel (0) target = $region13
  $region12: #{actor_critic_forward.1} parent=0 // pred_region
    _
  $region13: #{actor_critic_forward.1} parent=0 // pred_fallthru
    _
  // Predicated region
  $region14: #{actor_critic_forward.1} parent=0 // pred_check
    _
  $region15: #{actor_critic_forward.1} parent=0 // pred_check_branch
    %17 = sbr.rel (0) target = $region17
  $region16: #{actor_critic_forward.1} parent=0 // pred_region
    _
  $region17: #{actor_critic_forward.1} parent=0 // pred_fallthru
    _
  // Predicated region
  $region18: #{actor_critic_forward.1} parent=0 // pred_check
    _
  $region19: #{actor_critic_forward.1} parent=0 // pred_check_branch
    %19 = sbr.rel (0) target = $region21
  $region20: #{actor_critic_forward.1} parent=0 // pred_region
    _
  $region21: #{actor_critic_forward.1} parent=0 // pred_fallthru
    _
  %v21 = vld [vmem:[%s0] sm:$0xf]
  %v22 = vunpack.c.l.bf16 %v21
  %v23 = vld [vmem:[%s1] sm:$0x3]
  %v24 = vunpack.c.l.bf16 %v23
  %v25 = vld [vmem:[%s2] sm:$0x1]
  %27 = vset.pattern.permute.xlu0 0
  %28 = vperm.xlu0 %27, %v22
  %v29 = vpop.permute.xlu0 %28
  %v31 = vlaneseq
  %v32 = vshrl.u32 %v31, 7
  %v33 = vsub.s32 0, %v32
  %v34 = vrot.slane %v24, %v33
  %v35 = vmul.f32 %v29, %v34
  %v37 = vlaneseq
  %v38 = vshrl.u32 %v37, 7
  %v39 = vsub.s32 0, %v38
  %v40 = vrot.slane %v25, %v39
  %v42 = vadd.f32 %v40, %v35
  %43 = vset.pattern.permute.xlu0 1
  %44 = vperm.xlu0 %43, %v22
  %v45 = vpop.permute.xlu0 %44
  %v47 = vlaneseq
  %v48 = vshrl.u32 %v47, 7
  %v49 = vsub.s32 1, %v48
  %v50 = vrot.slane %v24, %v49
  %v51 = vmul.f32 %v45, %v50
  %v52 = vadd.f32 %v42, %v51
  %53 = vset.pattern.permute.xlu0 2
  %54 = vperm.xlu0 %53, %v22
  %v55 = vpop.permute.xlu0 %54
  %v57 = vlaneseq
  %v58 = vshrl.u32 %v57, 7
  %v59 = vsub.s32 2, %v58
  %v60 = vrot.slane %v24, %v59
  %v61 = vmul.f32 %v55, %v60
  %v62 = vadd.f32 %v52, %v61
  %63 = vset.pattern.permute.xlu0 3
  %64 = vperm.xlu0 %63, %v22
  %v65 = vpop.permute.xlu0 %64
  %v67 = vlaneseq
  %v68 = vshrl.u32 %v67, 7
  %v69 = vsub.s32 3, %v68
  %v70 = vrot.slane %v24, %v69
  %v71 = vmul.f32 %v65, %v70
  %v72 = vadd.f32 %v62, %v71
  %v73 = vmax.f32 %v72, 0.0
  %v74 = vpack.c.bf16 %v73, %v73
  %v75 = vld [vmem:[%s3] sm:$0xf]
  %v76 = vld [vmem:[%s3 + $0x4] sm:$0xf]
  %v77 = vld [vmem:[%s3 + $0x8] sm:$0xf]
  %v78 = vld [vmem:[%s3 + $0xc] sm:$0xf]
  %v79 = vld [vmem:[%s3 + $0x10] sm:$0xf]
  %v80 = vld [vmem:[%s3 + $0x14] sm:$0xf]
  %v81 = vld [vmem:[%s3 + $0x18] sm:$0xf]
  %v82 = vld [vmem:[%s3 + $0x1c] sm:$0xf]
  %v83 = vld [vmem:[%s3 + $0x20] sm:$0xf]
  %v84 = vld [vmem:[%s3 + $0x24] sm:$0xf]
  %v85 = vld [vmem:[%s3 + $0x28] sm:$0xf]
  %v86 = vld [vmem:[%s3 + $0x2c] sm:$0xf]
  %v87 = vld [vmem:[%s3 + $0x30] sm:$0xf]
  %v88 = vld [vmem:[%s3 + $0x34] sm:$0xf]
  %v89 = vld [vmem:[%s3 + $0x38] sm:$0xf]
  %v90 = vld [vmem:[%s3 + $0x3c] sm:$0xf]
  %v91 = vld [vmem:[%s4] sm:$0x1]
  %v93 = vlaneseq
  %v94 = vshrl.u32 %v93, 7
  %v95 = vsub.s32 0, %v94
  %v96 = vrot.slane %v91, %v95
  %v114 = vunpack.c.l.b16 %v75
  %v115 = vunpack.c.l.b16 %v76
  %v116 = vunpack.c.l.b16 %v77
  %v117 = vunpack.c.l.b16 %v78
  %v118 = vunpack.c.l.b16 %v79
  %v119 = vunpack.c.l.b16 %v80
  %v120 = vunpack.c.l.b16 %v81
  %v121 = vunpack.c.l.b16 %v82
  %v122 = vunpack.c.l.b16 %v83
  %v123 = vunpack.c.l.b16 %v84
  %v124 = vunpack.c.l.b16 %v85
  %v125 = vunpack.c.l.b16 %v86
  %v126 = vunpack.c.l.b16 %v87
  %v127 = vunpack.c.l.b16 %v88
  %v128 = vunpack.c.l.b16 %v89
  %v129 = vunpack.c.l.b16 %v90
  %v130 = vpack.c.b16 %v115, %v114
  %v131 = vpack.c.b16 %v117, %v116
  %v132 = vpack.c.b16 %v119, %v118
  %v133 = vpack.c.b16 %v121, %v120
  %v134 = vpack.c.b16 %v123, %v122
  %v135 = vpack.c.b16 %v125, %v124
  %v136 = vpack.c.b16 %v127, %v126
  %v137 = vpack.c.b16 %v129, %v128
  %146 = vmatprep.subr.bf16.mxu0 0
  %147 = vmatpush1.bf16.msra.mxu0 %v137
  %148 = vmatprep.subr.bf16.mxu0 0
  %149 = vmatpush1.bf16.msra.mxu0 %v136
  %150 = vmatprep.subr.bf16.mxu0 0
  %151 = vmatpush1.bf16.msra.mxu0 %v135
  %152 = vmatprep.subr.bf16.mxu0 0
  %153 = vmatpush1.bf16.msra.mxu0 %v134
  %154 = vmatprep.subr.bf16.mxu0 0
  %155 = vmatpush1.bf16.msra.mxu0 %v133
  %156 = vmatprep.subr.bf16.mxu0 0
  %157 = vmatpush1.bf16.msra.mxu0 %v132
  %158 = vmatprep.subr.bf16.mxu0 0
  %159 = vmatpush1.bf16.msra.mxu0 %v131
  %160 = vmatprep.subr.bf16.mxu0 0
  %161 = vmatpush1.bf16.msra.mxu0 %v130
  %162 = vmatprep.subr.bf16.mxu0 0
  %163 = vmatpush2.bf16.msra.mxu0 0
  %164 = vmatprep.subr.bf16.mxu0 0
  %165 = vmatpush2.bf16.msra.mxu0 0
  %166 = vmatprep.subr.bf16.mxu0 0
  %167 = vmatpush2.bf16.msra.mxu0 0
  %168 = vmatprep.subr.bf16.mxu0 0
  %169 = vmatpush2.bf16.msra.mxu0 0
  %170 = vmatprep.subr.bf16.mxu0 0
  %171 = vmatpush2.bf16.msra.mxu0 0
  %172 = vmatprep.subr.bf16.mxu0 0
  %173 = vmatpush2.bf16.msra.mxu0 0
  %174 = vmatprep.subr.bf16.mxu0 0
  %175 = vmatpush2.bf16.msra.mxu0 0
  %176 = vmatprep.subr.bf16.mxu0 0
  %177 = vmatpush2.bf16.msra.mxu0 0
  %178 = vmatprep.mubr.bf16.mxu0 0
  %179 = vmatmul.mubr.bf16.gmra.mxu0 %v74
  %v180 = vpop.f32.mrf.mxu0
  %v181 = vadd.f32 %v96, %v180
  %v182 = vpop.f32.mrf.mxu0
  %v183 = vpop.f32.mrf.mxu0
  %v184 = vpop.f32.mrf.mxu0
  %185 = vdwg.mxu0
  %vm186 = vcmask 64512
  %187 = vst.msk [vmem:[%s5] sm:$0xff] %vm186, %v181
  // Predicated region
  $region22: #{actor_critic_forward.1} parent=0 // pred_check
    _
  $region23: #{actor_critic_forward.1} parent=0 // pred_check_branch
    %189 = sbr.rel (0) target = $region25
  $region24: #{actor_critic_forward.1} parent=0 // pred_region
    _
  $region25: #{actor_critic_forward.1} parent=0 // pred_fallthru
    _
  // Predicated region
  $region26: #{actor_critic_forward.1} parent=0 // pred_check
    _
  $region27: #{actor_critic_forward.1} parent=0 // pred_check_branch
    %191 = sbr.rel (0) target = $region29
  $region28: #{actor_critic_forward.1} parent=0 // pred_region
    _
  $region29: #{actor_critic_forward.1} parent=0 // pred_fallthru
    _

</llo_original>
